<compile_context>
chip_gen: v5e
topology: v5e:2x2
jax: 0.10.0
libtpu: 0.0.40
codegen_flags: <defaults>
</compile_context>

<pallas_src>
import jax
import jax.numpy as jnp
from jax.experimental import pallas as pl
from jax.experimental.pallas import tpu as pltpu


def _round_up(n, m):
    return ((n + m - 1) // m) * m


def _vmem_capacity_bytes():
    """Physical VMEM per TensorCore; conservative 64 MiB (v7x) fallback."""
    try:
        info = pltpu.get_tpu_info()
        for attr in ("vmem_capacity_bytes", "vmem_bytes", "vmem_size_bytes"):
            cap = getattr(info, attr, None)
            if cap:
                return int(cap)
    except Exception:
        pass
    return 64 * 1024 * 1024


def _causal_dwconv_kernel(x_ref, wdw_ref, bdw_ref, wpwT_ref, bpw_ref, o_ref,
                          h_ref, halo_ref):
    # x_ref   : (1, TM, Dp)   current (batch, time-tile) input block (same for all n)
    # wdw_ref : (K, Dp)  f32  depthwise weights (tap k, channel d)
    # bdw_ref : (1, Dp)  f32  depthwise bias
    # wpwT_ref: (Dp, TN)      pointwise weight slab, transposed to (in, out), native dtype
    # bpw_ref : (1, TN)  f32  pointwise bias slab
    # o_ref   : (1, TM, TN)
    # h_ref   : (TM, Dp)      depthwise output, persists across the n axis
    # halo_ref: (HALO, Dp)    trailing rows of the previous time tile (causal carry)
    t = pl.program_id(1)
    n = pl.program_id(2)
    TM, _ = h_ref.shape
    K = wdw_ref.shape[0]
    HALO = halo_ref.shape[0]

    @pl.when(n == 0)
    def _depthwise():
        # Causal halo: zero at the start of every sequence, carried across time tiles
        # otherwise.  Requires sequential t iteration (see invariant at top of file).
        if K > 1:
            @pl.when(t == 0)
            def _init_halo():
                halo_ref[...] = jnp.zeros_like(halo_ref)

        xf = x_ref[0].astype(jnp.float32)                 # (TM, Dp)
        wdw = wdw_ref[...]                                # (K, Dp), already f32
        # tap k = K-1 (shift 0) is the aligned tap: use it to initialize the accumulator.
        acc = xf * wdw[K - 1:K, :]
        if K > 1:
            halo_f = halo_ref[...].astype(jnp.float32)    # (HALO, Dp)
            ext = jnp.concatenate([halo_f, xf], axis=0)   # (HALO + TM, Dp)
            for k in range(K - 1):                        # K is small & static
                start = HALO - (K - 1) + k
                acc = acc + ext[start:start + TM, :] * wdw[k:k + 1, :]
            # Save this tile's trailing rows for the next time tile (aligned copy).
            halo_ref[...] = x_ref[0, pl.ds(TM - HALO, HALO), :]
        h_ref[...] = (acc + bdw_ref[...]).astype(h_ref.dtype)

    # Pointwise (1x1) conv slab on the MXU: out[:, nTN:(n+1)TN] = h @ W_pw^T slab + b_pw.
    out = jnp.dot(h_ref[...], wpwT_ref[...], preferred_element_type=jnp.float32)
    out = out + bpw_ref[...]
    o_ref[0] = out.astype(o_ref.dtype)


def causal_depthwise_conv1d(x, w_dw, b_dw, w_pw, b_pw, kernel_size, *,
                            use_bf16_matmul=False,
                            max_time_tile=None, max_out_tile=None):
    """x: (B, T, D); w_dw: (D, K); b_dw: (D,); w_pw: (D_out, D_in); b_pw: (D,)."""
    B, T, D = x.shape
    K = int(kernel_size)
    assert w_dw.shape == (D, K) and b_dw.shape == (D,)
    assert w_pw.shape == (D, D) and b_pw.shape == (D,)

    Dp = _round_up(D, 128)                     # lane-dense channels (pads are zero)
    T8 = _round_up(T, 8)
    HALO = _round_up(max(K - 1, 1), 8)         # causal carry rows (>=8, multiple of 8)

    x_itemsize = jnp.dtype(x.dtype).itemsize
    w_dtype = jnp.bfloat16 if use_bf16_matmul else jnp.dtype(w_pw.dtype)
    w_itemsize = jnp.dtype(w_dtype).itemsize

    # ---- generation-aware VMEM budget (≈112 MiB on v5e/v6e, ≈48 MiB on v7x) ---------
    cap = _vmem_capacity_bytes()
    budget = max(32 * 1024 * 1024, cap - 16 * 1024 * 1024)

    # ---- tile selection ---------------------------------------------------------------
    # Output-channel tile TN bounds the resident pointwise weight slab; must divide Dp.
    if Dp <= 1024 and 2 * Dp * Dp * w_itemsize <= budget // 3:
        TN = Dp
    else:
        TN = 512 if Dp % 512 == 0 else (256 if Dp % 256 == 0 else 128)
    if max_out_tile is not None:
        cand = _round_up(min(int(max_out_tile), TN), 128)
        if Dp % cand == 0:
            TN = cand
    # Time tile TM: 1024 for small channel counts, 512 otherwise, shrunk to fit VMEM.
    TM = min(1024 if Dp <= 256 else 512, T8)
    TM = max(TM, HALO)
    if max_time_tile is not None:
        TM = max(HALO, min(TM, _round_up(int(max_time_tile), 8)))

    def _need(tm, tn):
        return (2 * tm * Dp * x_itemsize          # x block (double-buffered)
                + 2 * tm * tn * x_itemsize        # out block (double-buffered)
                + 2 * Dp * tn * w_itemsize        # pointwise weight slab (double-buffered)
                + tm * Dp * w_itemsize            # h scratch
                + HALO * Dp * x_itemsize          # halo scratch
                + 4 * (K + 4) * Dp * 4)           # small params
    while _need(TM, TN) > budget and TM > max(HALO, 64):
        TM = max(max(HALO, 64), _round_up(TM // 2, 8))
    while _need(TM, TN) > budget and TN > 128 and TN % 256 == 0:
        TN //= 2
    # TODO(synk): constant operands (wdw/bdw/bpw, and wpwT when TN == Dp) could be
    # single-buffered via pipeline_mode=pl.Buffered(1) to halve their VMEM footprint.

    Tp = _round_up(T, TM)
    n_t = Tp // TM
    n_n = Dp // TN
    assert TM % 8 == 0 and TN % 128 == 0 and Tp % TM == 0 and Dp % TN == 0
    assert TM >= HALO, "time tile must cover the causal halo"

    # ---- operand layout (hoisted out of the kernel) -----------------------------------
    needs_pad = (Tp != T) or (Dp != D)
    x_p = x if not needs_pad else jnp.pad(x, ((0, 0), (0, Tp - T), (0, Dp - D)))
    wdw = jnp.pad(jnp.transpose(w_dw, (1, 0)), ((0, 0), (0, Dp - D))).astype(jnp.float32)
    bdw = jnp.pad(b_dw, (0, Dp - D)).astype(jnp.float32).reshape(1, Dp)
    wpwT = jnp.pad(jnp.transpose(w_pw, (1, 0)),
                   ((0, Dp - D), (0, Dp - D))).astype(w_dtype)
    bpw = jnp.pad(b_pw, (0, Dp - D)).astype(jnp.float32).reshape(1, Dp)

    vmem_limit = int(min(budget, max(32 * 1024 * 1024, 2 * _need(TM, TN))))

    out_p = pl.pallas_call(
        _causal_dwconv_kernel,
        out_shape=jax.ShapeDtypeStruct((B, Tp, Dp), x.dtype),
        grid_spec=pltpu.PrefetchScalarGridSpec(
            num_scalar_prefetch=0,
            grid=(B, n_t, n_n),
            in_specs=[
                pl.BlockSpec((1, TM, Dp), lambda b, t, n: (b, t, 0)),
                pl.BlockSpec((K, Dp), lambda b, t, n: (0, 0)),
                pl.BlockSpec((1, Dp), lambda b, t, n: (0, 0)),
                pl.BlockSpec((Dp, TN), lambda b, t, n: (0, n)),
                pl.BlockSpec((1, TN), lambda b, t, n: (0, n)),
            ],
            out_specs=pl.BlockSpec((1, TM, TN), lambda b, t, n: (b, t, n)),
            scratch_shapes=[
                pltpu.VMEM((TM, Dp), w_dtype),      # depthwise result, reused across n
                pltpu.VMEM((HALO, Dp), x.dtype),    # causal halo carried across t
            ],
        ),
        compiler_params=pltpu.CompilerParams(
            # batch axis parallel (megacore shards it); time carries the causal halo in
            # scratch and n reuses the per-tile depthwise result -> both stay sequential.
            dimension_semantics=("parallel", "arbitrary", "arbitrary"),
            vmem_limit_bytes=vmem_limit,
        ),
    )(x_p, wdw, bdw, wpwT, bpw)

    if needs_pad:
        out_p = out_p[:, :T, :D]
    return out_p


def _reference(x, w_dw, b_dw, w_pw, b_pw, K):
    """Pure-JAX reference replicating the PyTorch forward exactly."""
    xt = jnp.transpose(x, (0, 2, 1))                       # (B, D, T)
    xp = jnp.pad(xt, ((0, 0), (0, 0), (K - 1, 0)))         # causal left-pad
    T = x.shape[1]
    h = jnp.zeros_like(xt)
    for k in range(K):
        h = h + xp[:, :, k:k + T] * w_dw[:, k][None, :, None]
    h = h + b_dw[None, :, None]
    out = jnp.einsum("oc,bct->bot", w_pw, h,
                     precision=jax.lax.Precision.HIGHEST) + b_pw[None, :, None]
    return jnp.transpose(out, (0, 2, 1))                   # (B, T, D)


def _run_case(B, T, D, K, key, **kw):
    kx, k1, k2, k3, k4 = jax.random.split(key, 5)
    x = jax.random.normal(kx, (B, T, D), dtype=jnp.float32)

    # Deterministic init mimicking nn.Conv1d (uniform +-1/sqrt(fan_in)).
    bound_dw = 1.0 / (1 * K) ** 0.5            # depthwise: fan_in = K (groups=dim)
    w_dw = jax.random.uniform(k1, (D, K), jnp.float32, -bound_dw, bound_dw)
    b_dw = jax.random.uniform(k2, (D,), jnp.float32, -bound_dw, bound_dw)
    bound_pw = 1.0 / (D * 1) ** 0.5            # pointwise: fan_in = D
    w_pw = jax.random.uniform(k3, (D, D), jnp.float32, -bound_pw, bound_pw)
    b_pw = jax.random.uniform(k4, (D,), jnp.float32, -bound_pw, bound_pw)

    out = causal_depthwise_conv1d(x, w_dw, b_dw, w_pw, b_pw, K, **kw)
    out = jax.block_until_ready(out)

    ref = _reference(x, w_dw, b_dw, w_pw, b_pw, K)
    assert out.shape == (B, T, D)
    assert jnp.allclose(out, ref, atol=2e-4, rtol=2e-4), \
        f"mismatch vs reference at {(B, T, D, K)}"


if __name__ == "__main__":
    key = jax.random.PRNGKey(0)
    k_a, k_b, k_c = jax.random.split(key, 3)

    # small module-consistent shape (single tile, channel padding path)
    _run_case(2, 8, 32, 3, k_a)
    # longer T with a forced small time tile: exercises the cross-tile causal halo carry
    _run_case(2, 300, 32, 3, k_b, max_time_tile=64)
    # wider channels with forced output-channel tiling + K=4: exercises the n grid axis
    _run_case(2, 40, 256, 4, k_c, max_time_tile=16, max_out_tile=128)

    print("KERNEL_OK")
</pallas_src>

<mosaic_0001>
module attributes {stable_mosaic.version = 11 : i64} {
  func.func @_causal_dwconv_kernel(%arg0: i32, %arg1: i32, %arg2: i32, %arg3: memref<1x8x128xf32, #tpu.memory_space<vmem>>, %arg4: memref<3x128xf32, #tpu.memory_space<vmem>>, %arg5: memref<1x128xf32, #tpu.memory_space<vmem>>, %arg6: memref<128x128xf32, #tpu.memory_space<vmem>>, %arg7: memref<1x128xf32, #tpu.memory_space<vmem>>, %arg8: memref<1x8x128xf32, #tpu.memory_space<vmem>>, %arg9: memref<8x128xf32, #tpu.memory_space<vmem>>, %arg10: memref<8x128xf32, #tpu.memory_space<vmem>>) attributes {dimension_semantics = [#tpu.dimension_semantics<parallel>, #tpu.dimension_semantics<arbitrary>, #tpu.dimension_semantics<arbitrary>], iteration_bounds = array<i64: 2, 1, 1>, scalar_prefetch = 0 : i64, scratch_operands = 2 : i64, tpu.core_type = #tpu.core_type<tc>, window_params = [{transform_indices = @transform_0, window_bounds = array<i64: 1, 8, 128>}, {pipeline_mode = #tpu.pipeline_mode<synchronous>, transform_indices = @transform_1, window_bounds = array<i64: 3, 128>}, {pipeline_mode = #tpu.pipeline_mode<synchronous>, transform_indices = @transform_2, window_bounds = array<i64: 1, 128>}, {transform_indices = @transform_3, window_bounds = array<i64: 128, 128>}, {transform_indices = @transform_4, window_bounds = array<i64: 1, 128>}, {transform_indices = @transform_5, window_bounds = array<i64: 1, 8, 128>}]} {
    %c0_i32 = arith.constant 0 : i32
    %0 = arith.cmpi eq, %arg2, %c0_i32 : i32
    %1 = arith.extui %0 : i1 to i32
    %c0_i32_0 = arith.constant 0 : i32
    %2 = arith.cmpi ne, %1, %c0_i32_0 : i32
    scf.if %2 {
      %c0_i32_9 = arith.constant 0 : i32
      %12 = arith.cmpi eq, %arg1, %c0_i32_9 : i32
      %13 = arith.extui %12 : i1 to i32
      %c0_i32_10 = arith.constant 0 : i32
      %14 = arith.cmpi ne, %13, %c0_i32_10 : i32
      scf.if %14 {
        %cst_27 = arith.constant 0.000000e+00 : f32
        %40 = vector.broadcast %cst_27 : f32 to vector<8x128xf32>
        %c0_28 = arith.constant 0 : index
        %c0_29 = arith.constant 0 : index
        %41 = vector.load %arg10[%c0_28, %c0_29] : memref<8x128xf32, #tpu.memory_space<vmem>>, vector<8x128xf32>
        tpu.vector_store %arg10[%c0_28, %c0_29], %40 {strides = array<i32>} : memref<8x128xf32, #tpu.memory_space<vmem>>, vector<8x128xf32>,
      } else {
      }
      %c0_11 = arith.constant 0 : index
      %c0_12 = arith.constant 0 : index
      %c0_13 = arith.constant 0 : index
      %15 = vector.load %arg3[%c0_11, %c0_12, %c0_13] : memref<1x8x128xf32, #tpu.memory_space<vmem>>, vector<1x8x128xf32>
      %16 = vector.shape_cast %15 : vector<1x8x128xf32> to vector<8x128xf32>
      %c0_14 = arith.constant 0 : index
      %c0_15 = arith.constant 0 : index
      %17 = vector.load %arg4[%c0_14, %c0_15] : memref<3x128xf32, #tpu.memory_space<vmem>>, vector<3x128xf32>
      %18 = vector.extract_strided_slice %17 {offsets = [2, 0], sizes = [1, 128], strides = [1, 1]} : vector<3x128xf32> to vector<1x128xf32>
      %19 = vector.broadcast %18 : vector<1x128xf32> to vector<8x128xf32>
      %20 = arith.mulf %16, %19 : vector<8x128xf32>
      %c0_16 = arith.constant 0 : index
      %c0_17 = arith.constant 0 : index
      %21 = vector.load %arg10[%c0_16, %c0_17] : memref<8x128xf32, #tpu.memory_space<vmem>>, vector<8x128xf32>
      %22 = tpu.concatenate %21, %16 in 0 : vector<8x128xf32>, vector<8x128xf32> -> vector<16x128xf32>
      %23 = vector.extract_strided_slice %22 {offsets = [6, 0], sizes = [8, 128], strides = [1, 1]} : vector<16x128xf32> to vector<8x128xf32>
      %24 = vector.extract_strided_slice %17 {offsets = [0, 0], sizes = [1, 128], strides = [1, 1]} : vector<3x128xf32> to vector<1x128xf32>
      %25 = vector.broadcast %24 : vector<1x128xf32> to vector<8x128xf32>
      %26 = arith.mulf %23, %25 : vector<8x128xf32>
      %27 = arith.addf %20, %26 : vector<8x128xf32>
      %28 = vector.extract_strided_slice %22 {offsets = [7, 0], sizes = [8, 128], strides = [1, 1]} : vector<16x128xf32> to vector<8x128xf32>
      %29 = vector.extract_strided_slice %17 {offsets = [1, 0], sizes = [1, 128], strides = [1, 1]} : vector<3x128xf32> to vector<1x128xf32>
      %30 = vector.broadcast %29 : vector<1x128xf32> to vector<8x128xf32>
      %31 = arith.mulf %28, %30 : vector<8x128xf32>
      %32 = arith.addf %27, %31 : vector<8x128xf32>
      %c0_18 = arith.constant 0 : index
      %c0_19 = arith.constant 0 : index
      %c0_20 = arith.constant 0 : index
      %33 = vector.load %arg3[%c0_18, %c0_19, %c0_20] : memref<1x8x128xf32, #tpu.memory_space<vmem>>, vector<1x8x128xf32>
      %34 = vector.shape_cast %33 : vector<1x8x128xf32> to vector<8x128xf32>
      %c0_21 = arith.constant 0 : index
      %c0_22 = arith.constant 0 : index
      %35 = vector.load %arg10[%c0_21, %c0_22] : memref<8x128xf32, #tpu.memory_space<vmem>>, vector<8x128xf32>
      tpu.vector_store %arg10[%c0_21, %c0_22], %34 {strides = array<i32>} : memref<8x128xf32, #tpu.memory_space<vmem>>, vector<8x128xf32>,
      %c0_23 = arith.constant 0 : index
      %c0_24 = arith.constant 0 : index
      %36 = vector.load %arg5[%c0_23, %c0_24] : memref<1x128xf32, #tpu.memory_space<vmem>>, vector<1x128xf32>
      %37 = vector.broadcast %36 : vector<1x128xf32> to vector<8x128xf32>
      %38 = arith.addf %32, %37 : vector<8x128xf32>
      %c0_25 = arith.constant 0 : index
      %c0_26 = arith.constant 0 : index
      %39 = vector.load %arg9[%c0_25, %c0_26] : memref<8x128xf32, #tpu.memory_space<vmem>>, vector<8x128xf32>
      tpu.vector_store %arg9[%c0_25, %c0_26], %38 {strides = array<i32>} : memref<8x128xf32, #tpu.memory_space<vmem>>, vector<8x128xf32>,
    } else {
    }
    %c0 = arith.constant 0 : index
    %c0_1 = arith.constant 0 : index
    %3 = vector.load %arg9[%c0, %c0_1] : memref<8x128xf32, #tpu.memory_space<vmem>>, vector<8x128xf32>
    %c0_2 = arith.constant 0 : index
    %c0_3 = arith.constant 0 : index
    %4 = vector.load %arg6[%c0_2, %c0_3] : memref<128x128xf32, #tpu.memory_space<vmem>>, vector<128x128xf32>
    %cst = arith.constant dense<0.000000e+00> : vector<8x128xf32>
    %5 = tpu.matmul %3, %4, %cst {dimension_numbers = #tpu.dot_dimension_numbers<[1], [0], [0], [1], [0, 0, 1, 1], [], []>} : vector<8x128xf32>, vector<128x128xf32>, vector<8x128xf32> -> vector<8x128xf32>
    %c0_4 = arith.constant 0 : index
    %c0_5 = arith.constant 0 : index
    %6 = vector.load %arg7[%c0_4, %c0_5] : memref<1x128xf32, #tpu.memory_space<vmem>>, vector<1x128xf32>
    %7 = vector.broadcast %6 : vector<1x128xf32> to vector<8x128xf32>
    %8 = arith.addf %5, %7 : vector<8x128xf32>
    %c0_6 = arith.constant 0 : index
    %c0_7 = arith.constant 0 : index
    %c0_8 = arith.constant 0 : index
    %9 = vector.load %arg8[%c0_6, %c0_7, %c0_8] : memref<1x8x128xf32, #tpu.memory_space<vmem>>, vector<1x8x128xf32>
    %10 = vector.shape_cast %9 : vector<1x8x128xf32> to vector<8x128xf32>
    %11 = vector.shape_cast %8 : vector<8x128xf32> to vector<1x8x128xf32>
    tpu.vector_store %arg8[%c0_6, %c0_7, %c0_8], %11 {strides = array<i32>} : memref<1x8x128xf32, #tpu.memory_space<vmem>>, vector<1x8x128xf32>,
    return
  }
  func.func @transform_0(%arg0: i32, %arg1: i32, %arg2: i32) -> (i32, i32, i32) {
    %c0_i32 = arith.constant 0 : i32
    %c0_i32_0 = arith.constant 0 : i32
    return %arg0, %arg1, %c0_i32 : i32, i32, i32
  }
  func.func @transform_1(%arg0: i32, %arg1: i32, %arg2: i32) -> (i32, i32) {
    %c0_i32 = arith.constant 0 : i32
    %c0_i32_0 = arith.constant 0 : i32
    %c0_i32_1 = arith.constant 0 : i32
    return %c0_i32, %c0_i32_0 : i32, i32
  }
  func.func @transform_2(%arg0: i32, %arg1: i32, %arg2: i32) -> (i32, i32) {
    %c0_i32 = arith.constant 0 : i32
    %c0_i32_0 = arith.constant 0 : i32
    %c0_i32_1 = arith.constant 0 : i32
    return %c0_i32, %c0_i32_0 : i32, i32
  }
  func.func @transform_3(%arg0: i32, %arg1: i32, %arg2: i32) -> (i32, i32) {
    %c0_i32 = arith.constant 0 : i32
    %c0_i32_0 = arith.constant 0 : i32
    return %c0_i32, %arg2 : i32, i32
  }
  func.func @transform_4(%arg0: i32, %arg1: i32, %arg2: i32) -> (i32, i32) {
    %c0_i32 = arith.constant 0 : i32
    %c0_i32_0 = arith.constant 0 : i32
    return %c0_i32, %arg2 : i32, i32
  }
  func.func @transform_5(%arg0: i32, %arg1: i32, %arg2: i32) -> (i32, i32, i32) {
    %c0_i32 = arith.constant 0 : i32
    return %arg0, %arg1, %arg2 : i32, i32, i32
  }
}

</mosaic_0001>

<llo_original>
// kernel: tpu_custom_call.1
$region0: #{tpu_custom_call.1}
  #allocation0 [shape = 'u32[]', space=smem, size = 0x4, offset = 0x4, fixed_abs, tag = 'smem constant byte address 0x4 - core index']
  #allocation1 [shape = 'u32[72,128]{1,0:T(1,128)}', space=vmem, size = 0x9000, scoped, tag = 'internal scratch']
  #allocation2 [shape = 'f32[8,128]{1,0:T(8,128)}', space=vmem, size = 0x1000, scoped, tag = 'scratch operand']
  #allocation3 [shape = 'f32[8,128]{1,0:T(8,128)}', space=vmem, size = 0x1000, scoped, tag = 'scratch operand']
  %s0 = inlined_call_operand.hbm [shape: f32[2,8,128], index: 0, kind: input, shape index: {}]
  %s1 = inlined_call_operand.hbm [shape: f32[3,128], index: 1, kind: input, shape index: {}]
  %s2 = inlined_call_operand.vmem [shape: f32[1,128], index: 2, kind: input, shape index: {}]
  %s3 = inlined_call_operand.hbm [shape: f32[128,128], index: 3, kind: input, shape index: {}]
  %s4 = inlined_call_operand.vmem [shape: f32[1,128], index: 4, kind: input, shape index: {}]
  %s5 = inlined_call_operand.hbm [shape: f32[2,8,128], index: 5, kind: output, shape index: {}]
  %s6 = sld [smem:[#allocation0]]
  $region73: #{tpu_custom_call.1} parent=0
    _
  %s8 = ssub.s32 1, %s6
  %s9 = scalar_select 0, %s8, %s6
  $region1: #{tpu_custom_call.1} parent=0
    #allocation4 [shape = 'u8[8192]{0}', space=vmem, size = 0x2000, scoped, tag = 'input window, operand 0']
    #allocation5 [shape = 's32[2]{0}', space=sflag, size = 0x8, scoped, tag = 'scoped memory for tpu_custom_call.1']
    #allocation6 [shape = 's32[2]{0}', space=sflag, size = 0x8, scoped, tag = 'scoped memory for tpu_custom_call.1']
    #allocation7 [shape = 'u8[2048]{0}', space=vmem, size = 0x800, scoped, tag = 'input window, operand 1, single buffered']
    #allocation8 [shape = 's32[1]{0}', space=sflag, size = 0x4, scoped, tag = 'scoped memory for tpu_custom_call.1']
    #allocation9 [shape = 'u8[65536]{0}', space=vmem, size = 0x10000, scoped, tag = 'input window, operand 3, single buffered']
    #allocation10 [shape = 'u8[8192]{0}', space=vmem, size = 0x2000, scoped, tag = 'output window, operand 0']
    %10 = vsyncpa [#allocation5], 0
    %s11 = scalar_lea.sflag [#allocation5], 1
    %12 = vsyncpa %s11, 0
    %13 = vsyncpa [#allocation8], 0
    %14 = vsyncpa [#allocation6], 0
    %s15 = scalar_lea.sflag [#allocation6], 1
    %16 = vsyncpa %s15, 0
    loop: start=0, step=1, limit=4
    $region2: #{tpu_custom_call.1} parent=1 // loop_pre_header
      _
    $region3: #{tpu_custom_call.1} parent=1 // loop_header
      %s18 = sphi 0, %s22
      %p19 = scmp.ge.s32.totalorder %s18, 4
      %s25 = sphi 0, %s44
      %s26 = sphi 0, %s40
      %s27 = sphi 0, %s36
      %s28 = sphi 0, %s25
      %s29 = sphi 0, %s26
      %s30 = sphi 0, %s27
      %s31 = sphi 0, %s28
      %s32 = sphi 0, %s29
      %s33 = sphi 0, %s30
      %s49 = sphi 0, %s51
      %s52 = sphi 0, %s49
      %s53 = sphi 0, %s52
      %s69 = sphi 0, %s53
      %s73 = sphi 0, %s73
      %s75 = sphi 0, %s73
      %s76 = sphi 0, %s75
      %s90 = sphi 0, %s76
      %s94 = sphi 0, %s94
      %s96 = sphi 0, %s94
      %s97 = sphi 0, %s96
      %s111 = sphi 0, %s97
      %s117 = sphi 0, %s119
      %s120 = sphi 0, %s117
      %s121 = sphi 0, %s120
      %s137 = sphi 0, %s121
      %s143 = sphi 0, %s145
      %s146 = sphi 0, %s143
      %s147 = sphi 0, %s146
      %s163 = sphi 0, %s147
      %s173 = sphi 0, %s175
      %s176 = sphi 0, %s173
      %s177 = sphi 0, %s176
      %s193 = sphi 0, %s177
    $region4: #{tpu_custom_call.1} parent=1 // loop_header_branch
      %21 = sbr.rel (%p19) target = $region8
    $region5: #{tpu_custom_call.1} parent=1 // loop_body
      %s23 = ssub.s32 %s18, 1
      %s24 = ssub.s32 %s18, 2
      %s34 = sadd.s32 1, %s27
      %p35 = scmp.ge.s32.totalorder %s34, 1
      %s36 = scalar_select %p35, 0, %s34
      %s37 = sadd.s32 1, %s26
      %s38 = scalar_select %p35, %s37, %s26
      %p39 = scmp.ge.s32.totalorder %s38, 1
      %s40 = scalar_select %p39, 0, %s38
      %s41 = sadd.s32 1, %s25
      %s42 = scalar_select %p39, %s41, %s25
      %p43 = scmp.ge.s32.totalorder %s42, 2
      %s44 = scalar_select %p43, 0, %s42
      %s45 = ssub.s32 %s25, %s44
      %s46 = ssub.s32 %s26, %s40
      %s47 = sor.u32 %s45, %s46
      %p48 = scmp.eq.s32.totalorder %s47, 0
      %s50 = sadd.s32 %s49, 1
      %s51 = scalar_select %p48, %s49, %s50
      %p54 = pneg %p48
      %p55 = scmp.eq.s32.totalorder %s18, 1
      %p56 = por %p54, %p55
      %p57 = scmp.ne.s32.totalorder %s49, %s52
      %p58 = scmp.eq.s32.totalorder %s18, 0
      %p59 = por %p57, %p58
      %p60 = scmp.ne.s32.totalorder %s49, %s52
      %p61 = scmp.eq.s32.totalorder %s23, 1
      %p62 = por %p60, %p61
      %p63 = scmp.ne.s32.totalorder %s52, %s53
      %p64 = scmp.eq.s32.totalorder %s23, 0
      %p65 = por %p63, %p64
      %p66 = scmp.ne.s32.totalorder %s52, %s53
      %p67 = scmp.eq.s32.totalorder %s24, 1
      %p68 = por %p66, %p67
      %p70 = scmp.ne.s32.totalorder %s53, %s69
      %p71 = scmp.eq.s32.totalorder %s24, 0
      %p72 = por %p70, %p71
      %s74 = sadd.s32 %s73, 1
      %p77 = scmp.eq.s32.totalorder %s18, 1
      %p78 = scmp.ne.s32.totalorder %s73, %s75
      %p79 = scmp.eq.s32.totalorder %s18, 0
      %p80 = por %p78, %p79
      %p81 = scmp.ne.s32.totalorder %s73, %s75
      %p82 = scmp.eq.s32.totalorder %s23, 1
      %p83 = por %p81, %p82
      %p84 = scmp.ne.s32.totalorder %s75, %s76
      %p85 = scmp.eq.s32.totalorder %s23, 0
      %p86 = por %p84, %p85
      %p87 = scmp.ne.s32.totalorder %s75, %s76
      %p88 = scmp.eq.s32.totalorder %s24, 1
      %p89 = por %p87, %p88
      %p91 = scmp.ne.s32.totalorder %s76, %s90
      %p92 = scmp.eq.s32.totalorder %s24, 0
      %p93 = por %p91, %p92
      %s95 = sadd.s32 %s94, 1
      %p98 = scmp.eq.s32.totalorder %s18, 1
      %p99 = scmp.ne.s32.totalorder %s94, %s96
      %p100 = scmp.eq.s32.totalorder %s18, 0
      %p101 = por %p99, %p100
      %p102 = scmp.ne.s32.totalorder %s94, %s96
      %p103 = scmp.eq.s32.totalorder %s23, 1
      %p104 = por %p102, %p103
      %p105 = scmp.ne.s32.totalorder %s96, %s97
      %p106 = scmp.eq.s32.totalorder %s23, 0
      %p107 = por %p105, %p106
      %p108 = scmp.ne.s32.totalorder %s96, %s97
      %p109 = scmp.eq.s32.totalorder %s24, 1
      %p110 = por %p108, %p109
      %p112 = scmp.ne.s32.totalorder %s97, %s111
      %p113 = scmp.eq.s32.totalorder %s24, 0
      %p114 = por %p112, %p113
      %s115 = ssub.s32 %s27, %s36
      %p116 = scmp.eq.s32.totalorder %s115, 0
      %s118 = sadd.s32 %s117, 1
      %s119 = scalar_select %p116, %s117, %s118
      %p122 = pneg %p116
      %p123 = scmp.eq.s32.totalorder %s18, 1
      %p124 = por %p122, %p123
      %p125 = scmp.ne.s32.totalorder %s117, %s120
      %p126 = scmp.eq.s32.totalorder %s18, 0
      %p127 = por %p125, %p126
      %p128 = scmp.ne.s32.totalorder %s117, %s120
      %p129 = scmp.eq.s32.totalorder %s23, 1
      %p130 = por %p128, %p129
      %p131 = scmp.ne.s32.totalorder %s120, %s121
      %p132 = scmp.eq.s32.totalorder %s23, 0
      %p133 = por %p131, %p132
      %p134 = scmp.ne.s32.totalorder %s120, %s121
      %p135 = scmp.eq.s32.totalorder %s24, 1
      %p136 = por %p134, %p135
      %p138 = scmp.ne.s32.totalorder %s121, %s137
      %p139 = scmp.eq.s32.totalorder %s24, 0
      %p140 = por %p138, %p139
      %s141 = ssub.s32 %s27, %s36
      %p142 = scmp.eq.s32.totalorder %s141, 0
      %s144 = sadd.s32 %s143, 1
      %s145 = scalar_select %p142, %s143, %s144
      %p148 = pneg %p142
      %p149 = scmp.eq.s32.totalorder %s18, 1
      %p150 = por %p148, %p149
      %p151 = scmp.ne.s32.totalorder %s143, %s146
      %p152 = scmp.eq.s32.totalorder %s18, 0
      %p153 = por %p151, %p152
      %p154 = scmp.ne.s32.totalorder %s143, %s146
      %p155 = scmp.eq.s32.totalorder %s23, 1
      %p156 = por %p154, %p155
      %p157 = scmp.ne.s32.totalorder %s146, %s147
      %p158 = scmp.eq.s32.totalorder %s23, 0
      %p159 = por %p157, %p158
      %p160 = scmp.ne.s32.totalorder %s146, %s147
      %p161 = scmp.eq.s32.totalorder %s24, 1
      %p162 = por %p160, %p161
      %p164 = scmp.ne.s32.totalorder %s147, %s163
      %p165 = scmp.eq.s32.totalorder %s24, 0
      %p166 = por %p164, %p165
      %s167 = ssub.s32 %s25, %s44
      %s168 = ssub.s32 %s26, %s40
      %s169 = sor.u32 %s167, %s168
      %s170 = ssub.s32 %s27, %s36
      %s171 = sor.u32 %s169, %s170
      %p172 = scmp.eq.s32.totalorder %s171, 0
      %s174 = sadd.s32 %s173, 1
      %s175 = scalar_select %p172, %s173, %s174
      %p178 = pneg %p172
      %p179 = scmp.eq.s32.totalorder %s18, 1
      %p180 = por %p178, %p179
      %p181 = scmp.ne.s32.totalorder %s173, %s176
      %p182 = scmp.eq.s32.totalorder %s18, 0
      %p183 = por %p181, %p182
      %p184 = scmp.ne.s32.totalorder %s173, %s176
      %p185 = scmp.eq.s32.totalorder %s23, 1
      %p186 = por %p184, %p185
      %p187 = scmp.ne.s32.totalorder %s176, %s177
      %p188 = scmp.eq.s32.totalorder %s23, 0
      %p189 = por %p187, %p188
      %p190 = scmp.ne.s32.totalorder %s176, %s177
      %p191 = scmp.eq.s32.totalorder %s24, 1
      %p192 = por %p190, %p191
      %p194 = scmp.ne.s32.totalorder %s177, %s193
      %p195 = scmp.eq.s32.totalorder %s24, 0
      %p196 = por %p194, %p195
      %p197 = scmp.le.s32.totalorder 1, %s18
      %p198 = scmp.lt.s32.totalorder %s18, 3
      %p199 = pnand %p197, %p198
      %p200 = pneg %p199
      // Predicated region
      $region9: #{tpu_custom_call.1} parent=5 // pred_check
        _
      $region10: #{tpu_custom_call.1} parent=5 // pred_check_branch
        %202 = sbr.rel (%p199) target = $region12
      $region11: #{tpu_custom_call.1} parent=5 // pred_region
        %s203 = ssub.s32 %s18, 1
        // Predicated region
        $region13: #{tpu_custom_call.1} parent=11 // pred_check
          %p204 = pneg %p86
        $region14: #{tpu_custom_call.1} parent=11 // pred_check_branch
          %206 = sbr.rel (%p204) target = $region16
        $region15: #{tpu_custom_call.1} parent=11 // pred_region
          %208 = vsyncadd [#allocation8], 0
          %s210 = sshll.u32 %s1, 4
          %s211 = int_to_ptr.hbm [resolvable:$true] %s210
          %s212 = sshll.u32 [#allocation7], 4
          %s213 = int_to_ptr.vmem [resolvable:$true] %s212
          %215 = dma.hbm_to_vmem [thread:$0]  %s211, 64, %s213, [#allocation8]
        $region16: #{tpu_custom_call.1} parent=11 // pred_fallthru
          _
        // Predicated region
        $region17: #{tpu_custom_call.1} parent=11 // pred_check
          %p216 = pneg %p107
        $region18: #{tpu_custom_call.1} parent=11 // pred_check_branch
          %218 = sbr.rel (%p216) target = $region20
        $region19: #{tpu_custom_call.1} parent=11 // pred_region
          _
        $region20: #{tpu_custom_call.1} parent=11 // pred_fallthru
          _
        // Predicated region
        $region21: #{tpu_custom_call.1} parent=11 // pred_check
          %p219 = pneg %p133
        $region22: #{tpu_custom_call.1} parent=11 // pred_check_branch
          %221 = sbr.rel (%p219) target = $region24
        $region23: #{tpu_custom_call.1} parent=11 // pred_region
          %223 = vsyncadd [#allocation8], 0
          %s224 = smul.addr %s30, 8
          %s225 = scalar_lea.hbm %s3, %s224
          %s226 = sshll.u32 %s225, 4
          %s227 = int_to_ptr.hbm [resolvable:$true] %s226
          %s228 = sshll.u32 [#allocation9], 4
          %s229 = int_to_ptr.vmem [resolvable:$true] %s228
          %234 = dma.hbm_to_vmem [thread:$0]  %s227, 2048, %s229, [#allocation8], 128, 128, 8
        $region24: #{tpu_custom_call.1} parent=11 // pred_fallthru
          _
        // Predicated region
        $region25: #{tpu_custom_call.1} parent=11 // pred_check
          %p235 = pneg %p159
        $region26: #{tpu_custom_call.1} parent=11 // pred_check_branch
          %237 = sbr.rel (%p235) target = $region28
        $region27: #{tpu_custom_call.1} parent=11 // pred_region
          %p238 = scmp.lt.s32.totalorder %s30, 0
          %s239 = scalar_select %p238, %s30, 0
          %s240 = scalar_lea.vmem %s4, %s239
        $region28: #{tpu_custom_call.1} parent=11 // pred_fallthru
          _
      $region12: #{tpu_custom_call.1} parent=5 // pred_fallthru
        _
      %p241 = scmp.lt.s32.totalorder %s18, 2
      // Predicated region
      $region29: #{tpu_custom_call.1} parent=5 // pred_check
        %p242 = pneg %p241
      $region30: #{tpu_custom_call.1} parent=5 // pred_check_branch
        %244 = sbr.rel (%p242) target = $region32
      $region31: #{tpu_custom_call.1} parent=5 // pred_region
        // Predicated region
        $region33: #{tpu_custom_call.1} parent=31 // pred_check
          %p245 = pneg %p59
        $region34: #{tpu_custom_call.1} parent=31 // pred_check_branch
          %247 = sbr.rel (%p245) target = $region36
        $region35: #{tpu_custom_call.1} parent=31 // pred_region
          %s248 = sand.u32 %s49, 1
          %s249 = scalar_lea.sflag [#allocation5], %s248
          %s250 = sand.u32 %s49, 1
          %s251 = smul.addr %s250, 8
          %s252 = scalar_lea.vmem [#allocation4], %s251
          %254 = vsyncadd %s249, 0
          %s255 = sadd.s32 %s26, %s25
          %s256 = smul.addr %s255, 8
          %s257 = scalar_lea.hbm %s0, %s256
          %s259 = sshll.u32 %s257, 4
          %s260 = int_to_ptr.hbm [resolvable:$true] %s259
          %s261 = sshll.u32 %s252, 4
          %s262 = int_to_ptr.vmem [resolvable:$true] %s261
          %264 = dma.hbm_to_vmem [thread:$0]  %s260, 128, %s262, %s249
        $region36: #{tpu_custom_call.1} parent=31 // pred_fallthru
          _
      $region32: #{tpu_custom_call.1} parent=5 // pred_fallthru
        _
      %p265 = scmp.le.s32.totalorder 1, %s18
      %p266 = scmp.lt.s32.totalorder %s18, 3
      %p267 = pnand %p265, %p266
      %p268 = pneg %p267
      // Predicated region
      $region37: #{tpu_custom_call.1} parent=5 // pred_check
        _
      $region38: #{tpu_custom_call.1} parent=5 // pred_check_branch
        %270 = sbr.rel (%p267) target = $region40
      $region39: #{tpu_custom_call.1} parent=5 // pred_region
        %s271 = ssub.s32 %s18, 1
        %s272 = sand.u32 %s52, 1
        %s273 = scalar_lea.sflag [#allocation5], %s272
        %s274 = sand.u32 %s52, 1
        %s275 = smul.addr %s274, 8
        %s276 = scalar_lea.vmem [#allocation4], %s275
        // Predicated region
        $region41: #{tpu_custom_call.1} parent=39 // pred_check
          %p277 = pneg %p65
        $region42: #{tpu_custom_call.1} parent=39 // pred_check_branch
          %279 = sbr.rel (%p277) target = $region44
        $region43: #{tpu_custom_call.1} parent=39 // pred_region
          %281 = dma.done %s273, 128
        $region44: #{tpu_custom_call.1} parent=39 // pred_fallthru
          _
        // Predicated region
        $region45: #{tpu_custom_call.1} parent=39 // pred_check
          %p282 = pneg %p86
        $region46: #{tpu_custom_call.1} parent=39 // pred_check_branch
          %284 = sbr.rel (%p282) target = $region48
        $region47: #{tpu_custom_call.1} parent=39 // pred_region
          %286 = dma.done [#allocation8], 64
        $region48: #{tpu_custom_call.1} parent=39 // pred_fallthru
          _
        // Predicated region
        $region49: #{tpu_custom_call.1} parent=39 // pred_check
          %p287 = pneg %p133
        $region50: #{tpu_custom_call.1} parent=39 // pred_check_branch
          %289 = sbr.rel (%p287) target = $region52
        $region51: #{tpu_custom_call.1} parent=39 // pred_region
          %291 = dma.done [#allocation8], 2048
        $region52: #{tpu_custom_call.1} parent=39 // pred_fallthru
          _
        %s292 = sand.u32 %s52, 1
        %s293 = scalar_lea.sflag [#allocation5], %s292
        %s294 = sand.u32 %s52, 1
        %s295 = smul.addr %s294, 8
        %s296 = scalar_lea.vmem [#allocation4], %s295
        %p297 = pneg %p65
        %p298 = pneg %p62
        %p299 = pneg %p86
        %p300 = pneg %p83
        %p301 = pneg %p107
        %p302 = pneg %p104
        %p303 = pneg %p133
        %p304 = pneg %p130
        %p305 = scmp.lt.s32.totalorder %s30, 0
        %s306 = scalar_select %p305, %s30, 0
        %s307 = scalar_lea.vmem %s4, %s306
        %p308 = pneg %p159
        %p309 = pneg %p156
        %p310 = pneg %p189
        %p311 = pneg %p186
        %s312 = sand.u32 %s176, 1
        %s313 = scalar_lea.sflag [#allocation6], %s312
        %s314 = sand.u32 %s176, 1
        %s315 = smul.addr %s314, 8
        %s316 = scalar_lea.vmem [#allocation10], %s315
        %p317 = scmp.lt.s32.totalorder %s30, 0
        %s318 = scalar_select %p317, %s30, 0
        %s319 = scalar_lea.vmem %s4, %s318
        %p320 = scmp.eq.s32.totalorder %s30, 0
        // Predicated region
        $region53: #{tpu_custom_call.1} parent=39 // pred_check
          %p321 = pneg %p320
        $region54: #{tpu_custom_call.1} parent=39 // pred_check_branch
          %323 = sbr.rel (%p321) target = $region56
        $region55: #{tpu_custom_call.1} parent=39 // pred_region
          %p324 = scmp.eq.s32.totalorder %s29, 0
          // Predicated region
          $region57: #{tpu_custom_call.1} parent=55 // pred_check
            %p325 = pneg %p324
          $region58: #{tpu_custom_call.1} parent=55 // pred_check_branch
            %327 = sbr.rel (%p325) target = $region60
          $region59: #{tpu_custom_call.1} parent=55 // pred_region
            %328 = vst [vmem:[#allocation3] sm:$0xff] 0.0
          $region60: #{tpu_custom_call.1} parent=55 // pred_fallthru
            _
          %v329 = vld [vmem:[%s276] sm:$0xff]
          %v330 = vld [vmem:[#allocation7] sm:$0x7]
          %v331 = vperm.slane %v330, 2
          %v332 = vmul.f32 %v329, %v331
          %v333 = vld [vmem:[#allocation3] sm:$0xff]
          %v334 = vperm.slane %v330, 0
          %v335 = vmul.f32 %v333, %v334
          %v336 = vmul.f32 %v329, %v334
          %vm339 = vcmask 1041408
          %v340 = vrot.slane %v335, 6
          %v341 = vrot.slane %v336, 6
          %v342 = vsel %vm339, %v340, %v341
          %v344 = vadd.f32 %v332, %v342
          %v345 = vperm.slane %v330, 1
          %v346 = vmul.f32 %v333, %v345
          %v347 = vmul.f32 %v329, %v345
          %vm350 = vcmask 1040384
          %v351 = vrot.slane %v346, 7
          %v352 = vrot.slane %v347, 7
          %v353 = vsel %vm350, %v351, %v352
          %v355 = vadd.f32 %v344, %v353
          %356 = vst [vmem:[#allocation3] sm:$0xff] %v329
          %v357 = vld [vmem:[%s2] sm:$0x1]
          %v359 = vperm.slane %v357, 0
          %v361 = vadd.f32 %v355, %v359
          %362 = vst [vmem:[#allocation2] sm:$0xff] %v361
        $region56: #{tpu_custom_call.1} parent=39 // pred_fallthru
          _
        %v363 = vld [vmem:[#allocation2] sm:$0xff]
        %v364 = vld [vmem:[#allocation9] sm:$0xff]
        %v365 = vld [vmem:[#allocation9 + $0x8] sm:$0xff]
        %v366 = vld [vmem:[#allocation9 + $0x10] sm:$0xff]
        %v367 = vld [vmem:[#allocation9 + $0x18] sm:$0xff]
        %v368 = vld [vmem:[#allocation9 + $0x20] sm:$0xff]
        %v369 = vld [vmem:[#allocation9 + $0x28] sm:$0xff]
        %v370 = vld [vmem:[#allocation9 + $0x30] sm:$0xff]
        %v371 = vld [vmem:[#allocation9 + $0x38] sm:$0xff]
        %v372 = vld [vmem:[#allocation9 + $0x40] sm:$0xff]
        %v373 = vld [vmem:[#allocation9 + $0x48] sm:$0xff]
        %v374 = vld [vmem:[#allocation9 + $0x50] sm:$0xff]
        %v375 = vld [vmem:[#allocation9 + $0x58] sm:$0xff]
        %v376 = vld [vmem:[#allocation9 + $0x60] sm:$0xff]
        %v377 = vld [vmem:[#allocation9 + $0x68] sm:$0xff]
        %v378 = vld [vmem:[#allocation9 + $0x70] sm:$0xff]
        %v379 = vld [vmem:[#allocation9 + $0x78] sm:$0xff]
        %v380 = vld [vmem:[%s319] sm:$0x1]
        %v382 = vperm.slane %v380, 0
        %384 = vmatpush.msra.mxu0 %v379
        %385 = vmatpush.msra.mxu0 %v378
        %386 = vmatpush.msra.mxu0 %v377
        %387 = vmatpush.msra.mxu0 %v376
        %388 = vmatpush.msra.mxu0 %v375
        %389 = vmatpush.msra.mxu0 %v374
        %390 = vmatpush.msra.mxu0 %v373
        %391 = vmatpush.msra.mxu0 %v372
        %392 = vmatpush.msra.mxu0 %v371
        %393 = vmatpush.msra.mxu0 %v370
        %394 = vmatpush.msra.mxu0 %v369
        %395 = vmatpush.msra.mxu0 %v368
        %396 = vmatpush.msra.mxu0 %v367
        %397 = vmatpush.msra.mxu0 %v366
        %398 = vmatpush.msra.mxu0 %v365
        %399 = vmatpush.msra.mxu0 %v364
        %400 = vmatmul.f32.gmra.mxu0 %v363
        %v401 = vpop.f32.mrf.mxu0
        %v402 = vadd.f32 %v382, %v401
        %403 = vdwg.mxu0
        %404 = vst [vmem:[%s316] sm:$0xff] %v402
        %s405 = sand.u32 %s176, 1
        %s406 = scalar_lea.sflag [#allocation6], %s405
        %s407 = sand.u32 %s176, 1
        %s408 = smul.addr %s407, 8
        %s409 = scalar_lea.vmem [#allocation10], %s408
        // Predicated region
        $region61: #{tpu_custom_call.1} parent=39 // pred_check
          %p410 = pneg %p186
        $region62: #{tpu_custom_call.1} parent=39 // pred_check_branch
          %412 = sbr.rel (%p410) target = $region64
        $region63: #{tpu_custom_call.1} parent=39 // pred_region
          %414 = vsyncadd %s406, 0
          %s415 = sadd.s32 %s30, %s29
          %s416 = sadd.s32 %s415, %s28
          %s417 = smul.addr %s416, 8
          %s418 = scalar_lea.hbm %s5, %s417
          %s420 = sshll.u32 %s409, 4
          %s421 = int_to_ptr.vmem [resolvable:$true] %s420
          %s422 = sshll.u32 %s418, 4
          %s423 = int_to_ptr.hbm [resolvable:$true] %s422
          %425 = dma.vmem_to_hbm [thread:$0]  %s421, 128, %s423, %s406
        $region64: #{tpu_custom_call.1} parent=39 // pred_fallthru
          _
      $region40: #{tpu_custom_call.1} parent=5 // pred_fallthru
        _
      %p426 = scmp.le.s32.totalorder 2, %s18
      // Predicated region
      $region65: #{tpu_custom_call.1} parent=5 // pred_check
        %p427 = pneg %p426
      $region66: #{tpu_custom_call.1} parent=5 // pred_check_branch
        %429 = sbr.rel (%p427) target = $region68
      $region67: #{tpu_custom_call.1} parent=5 // pred_region
        %s430 = ssub.s32 %s18, 2
        // Predicated region
        $region69: #{tpu_custom_call.1} parent=67 // pred_check
          %p431 = pneg %p192
        $region70: #{tpu_custom_call.1} parent=67 // pred_check_branch
          %433 = sbr.rel (%p431) target = $region72
        $region71: #{tpu_custom_call.1} parent=67 // pred_region
          %s434 = sand.u32 %s177, 1
          %s435 = scalar_lea.sflag [#allocation6], %s434
          %s436 = sand.u32 %s177, 1
          %s437 = smul.addr %s436, 8
          %s438 = scalar_lea.vmem [#allocation10], %s437
          %440 = dma.done %s435, 128
        $region72: #{tpu_custom_call.1} parent=67 // pred_fallthru
          _
      $region68: #{tpu_custom_call.1} parent=5 // pred_fallthru
        _
    $region6: #{tpu_custom_call.1} parent=1 // loop_footer
      %s22 = sadd.s32 1, %s18
    $region7: #{tpu_custom_call.1} parent=1 // loop_footer_branch
      %17 = sbr.rel target = $region3
    $region8: #{tpu_custom_call.1} parent=1 // loop_exit
      _
    %441 = vsyncpa [#allocation5], 1
    %s442 = scalar_lea.sflag [#allocation5], 1
    %443 = vsyncpa %s442, 1
    %444 = vsyncpa [#allocation8], 1
    %445 = vsyncpa [#allocation6], 1
    %s446 = scalar_lea.sflag [#allocation6], 1
    %447 = vsyncpa %s446, 1

</llo_original>
